<compile_context>
chip_gen: v5e
topology: v5e:2x2
jax: 0.10.0
libtpu: 0.0.40
codegen_flags: <defaults>
</compile_context>

<pallas_src>
import jax
import jax.numpy as jnp
import numpy as np
from jax.experimental import pallas as pl
from jax.experimental.pallas import tpu as pltpu

LN_EPS = 1e-5  # PyTorch nn.LayerNorm default


def _duration_predictor_kernel(
    x_ref,       # [R, K*C] bf16   im2col'd input rows (R = b_blk*T)
    w1_ref,      # [K*C, F] bf16
    b1_ref,      # [1, F]  f32
    g1_ref,      # [1, F]  f32
    be1_ref,     # [1, F]  f32
    w2_ref,      # [K, F, F] bf16
    b2_ref,      # [1, F]  f32
    g2_ref,      # [1, F]  f32
    be2_ref,     # [1, F]  f32
    wl_ref,      # [1, F]  f32   final linear weight (row)
    sprev_ref,   # [R, R]  bf16  shift matrix: row r picks h[r-1], zero at t==0
    snext_ref,   # [R, R]  bf16  shift matrix: row r picks h[r+1], zero at t==T-1
    bl_ref,      # [1]     f32   final linear bias, in SMEM
    o_ref,       # [b_blk, T] f32
):
    b_blk, T = o_ref.shape
    bf = jnp.bfloat16

    # ---- Conv1d #1 (C -> F, kernel=K, padding=1): single im2col MXU matmul ----
    h = jnp.dot(x_ref[...], w1_ref[...], preferred_element_type=jnp.float32)
    h = h + b1_ref[...]

    # ---- LayerNorm(F) (f32 stats, single pass) + ReLU  (Dropout == identity) ----
    mu = jnp.mean(h, axis=-1, keepdims=True)
    var = jnp.mean(h * h, axis=-1, keepdims=True) - mu * mu
    h = (h - mu) * jax.lax.rsqrt(var + LN_EPS) * g1_ref[...] + be1_ref[...]
    h = jnp.maximum(h, 0.0)

    # ---- Conv1d #2 (F -> F, kernel=K, padding=1) ----
    # Shifted taps via tiny {0,1} shift-matrix matmuls (boundary zeros baked in).
    h_bf = h.astype(bf)
    h_prev = jnp.dot(sprev_ref[...], h_bf, preferred_element_type=jnp.float32)
    h_next = jnp.dot(snext_ref[...], h_bf, preferred_element_type=jnp.float32)

    h2 = jnp.dot(h_prev.astype(bf), w2_ref[0], preferred_element_type=jnp.float32)
    h2 = h2 + jnp.dot(h_bf, w2_ref[1], preferred_element_type=jnp.float32)
    h2 = h2 + jnp.dot(h_next.astype(bf), w2_ref[2], preferred_element_type=jnp.float32)
    h2 = h2 + b2_ref[...]

    # ---- LayerNorm(F) + ReLU ----
    mu2 = jnp.mean(h2, axis=-1, keepdims=True)
    var2 = jnp.mean(h2 * h2, axis=-1, keepdims=True) - mu2 * mu2
    h2 = (h2 - mu2) * jax.lax.rsqrt(var2 + LN_EPS) * g2_ref[...] + be2_ref[...]
    h2 = jnp.maximum(h2, 0.0)

    # ---- Linear(F -> 1) + ReLU + squeeze(-1): VPU multiply + lane reduce ----
    prod = (h2 * wl_ref[...]).reshape(b_blk, T, -1)      # sublane-tile split
    out = jnp.sum(prod, axis=-1) + bl_ref[0]             # [b_blk, T], T in lanes
    o_ref[...] = jnp.maximum(out, 0.0)


def duration_predictor_pallas(x, params, *, b_blk=None):
    """x: [B, T, C] float32 -> [B, T] float32."""
    B, T, C = x.shape
    K, F, _ = params["w2"].shape
    if b_blk is None:
        b_blk = B
    assert B % b_blk == 0
    assert (b_blk * T) % 8 == 0, "b_blk*T must be sublane-aligned"
    R = b_blk * T
    nb = B // b_blk

    # Wrapper-side im2col along time (padding=1 each side); fold batch into rows.
    x_pad = jnp.pad(x, ((0, 0), (1, 1), (0, 0)))
    x_im2col = jnp.concatenate([x_pad[:, k:k + T, :] for k in range(K)], axis=-1)
    x_rows = x_im2col.reshape(B * T, K * C).astype(jnp.bfloat16)        # [B*T, K*C]

    # Conv weights as bf16 MXU operands; w1 flattened to [K*C, F] for one matmul.
    w1_kc = params["w1"].reshape(K * C, F).astype(jnp.bfloat16)
    w2 = params["w2"].astype(jnp.bfloat16)                              # [K, F, F]

    # {0,1} shift matrices for conv2's neighbor taps (same for every block).
    # S_prev[r, c] = 1 iff c == r-1 and t(r) != 0     -> h_prev[r] = h[r-1]
    # S_next[r, c] = 1 iff c == r+1 and t(r) != T-1   -> h_next[r] = h[r+1]
    t_idx = jnp.tile(jnp.arange(T), b_blk)                               # [R]
    row = jnp.arange(R)
    s_prev = ((row[:, None] - 1 == row[None, :]) &
              (t_idx[:, None] != 0)).astype(jnp.bfloat16)                # [R, R]
    s_next = ((row[:, None] + 1 == row[None, :]) &
              (t_idx[:, None] != T - 1)).astype(jnp.bfloat16)            # [R, R]

    return pl.pallas_call(
        _duration_predictor_kernel,
        out_shape=jax.ShapeDtypeStruct((B, T), jnp.float32),
        grid_spec=pltpu.PrefetchScalarGridSpec(
            num_scalar_prefetch=0,
            grid=(nb,),
            in_specs=[
                pl.BlockSpec((R, K * C), lambda i: (i, 0)),     # x rows
                pl.BlockSpec((K * C, F), lambda i: (0, 0)),     # w1
                pl.BlockSpec((1, F), lambda i: (0, 0)),         # b1
                pl.BlockSpec((1, F), lambda i: (0, 0)),         # g1
                pl.BlockSpec((1, F), lambda i: (0, 0)),         # be1
                pl.BlockSpec((K, F, F), lambda i: (0, 0, 0)),   # w2
                pl.BlockSpec((1, F), lambda i: (0, 0)),         # b2
                pl.BlockSpec((1, F), lambda i: (0, 0)),         # g2
                pl.BlockSpec((1, F), lambda i: (0, 0)),         # be2
                pl.BlockSpec((1, F), lambda i: (0, 0)),         # wl
                pl.BlockSpec((R, R), lambda i: (0, 0)),         # shift prev
                pl.BlockSpec((R, R), lambda i: (0, 0)),         # shift next
                pl.BlockSpec(memory_space=pltpu.MemorySpace.SMEM),  # bl scalar
            ],
            out_specs=pl.BlockSpec((b_blk, T), lambda i: (i, 0)),
        ),
        compiler_params=pltpu.CompilerParams(
            dimension_semantics=("parallel",),
        ),
    )(
        x_rows,
        w1_kc, params["b1"], params["g1"], params["be1"],
        w2, params["b2"], params["g2"], params["be2"],
        params["wl"], s_prev, s_next, params["bl"],
    )


def duration_predictor_ref(x, params):
    """Pure-JAX f32 reference mirroring the PyTorch forward (dropout=identity)."""
    def conv1d(h, w, b):  # h [B,T,Cin], w [K,Cin,Cout]
        T = h.shape[1]
        hp = jnp.pad(h, ((0, 0), (1, 1), (0, 0)))
        out = sum(jnp.einsum("btc,cf->btf", hp[:, k:k + T], w[k])
                  for k in range(w.shape[0]))
        return out + b

    def layernorm(h, g, be):
        mu = jnp.mean(h, axis=-1, keepdims=True)
        var = jnp.mean((h - mu) ** 2, axis=-1, keepdims=True)
        return (h - mu) * jax.lax.rsqrt(var + LN_EPS) * g + be

    h = conv1d(x, params["w1"], params["b1"])
    h = jax.nn.relu(layernorm(h, params["g1"], params["be1"]))
    h = conv1d(h, params["w2"], params["b2"])
    h = jax.nn.relu(layernorm(h, params["g2"], params["be2"]))
    out = h @ params["wl"][0] + params["bl"][0]    # Linear(F->1) + squeeze(-1)
    return jax.nn.relu(out)


def init_params(key, encoder_dim, filter_size, kernel_size):
    ks = jax.random.split(key, 8)
    C, F, K = encoder_dim, filter_size, kernel_size
    # PyTorch Conv1d weight is [out, in, K]; store as [K, in, out] for the kernel.
    w1_t = 0.1 * jax.random.normal(ks[0], (F, C, K), jnp.float32)
    w2_t = 0.1 * jax.random.normal(ks[1], (F, F, K), jnp.float32)
    return {
        "w1": jnp.transpose(w1_t, (2, 1, 0)),                              # [K, C, F]
        "b1": 0.01 * jax.random.normal(ks[2], (1, F), jnp.float32),
        "g1": 1.0 + 0.1 * jax.random.normal(ks[6], (1, F), jnp.float32),
        "be1": 0.01 * jax.random.normal(ks[7], (1, F), jnp.float32),
        "w2": jnp.transpose(w2_t, (2, 1, 0)),                              # [K, F, F]
        "b2": 0.01 * jax.random.normal(ks[3], (1, F), jnp.float32),
        "g2": jnp.ones((1, F), jnp.float32),
        "be2": jnp.zeros((1, F), jnp.float32),
        "wl": 0.1 * jax.random.normal(ks[4], (1, F), jnp.float32),         # Linear [1, F]
        "bl": 0.01 * jax.random.normal(ks[5], (1,), jnp.float32),
    }


if __name__ == "__main__":
    # Small shapes consistent with the module's forward.
    B, T = 2, 8
    encoder_dim = 32
    duration_predictor_filter_size = 32
    duration_predictor_kernel_size = 3  # module hardcodes padding=1 -> K=3 keeps length

    key = jax.random.PRNGKey(0)
    kx, kp = jax.random.split(key)
    x = jax.random.normal(kx, (B, T, encoder_dim), jnp.float32)
    params = init_params(kp, encoder_dim, duration_predictor_filter_size,
                         duration_predictor_kernel_size)

    out = jax.block_until_ready(duration_predictor_pallas(x, params))
    ref = jax.block_until_ready(duration_predictor_ref(x, params))

    assert out.shape == (B, T)
    # bf16 MXU operands vs. f32 reference -> modest tolerance (values are O(1)).
    np.testing.assert_allclose(np.asarray(out), np.asarray(ref),
                               rtol=5e-2, atol=5e-2)
    print("KERNEL_OK")
</pallas_src>

<mosaic_0001>
module attributes {stable_mosaic.version = 11 : i64} {
  func.func @_duration_predictor_kernel(%arg0: i32, %arg1: memref<16x96xbf16, #tpu.memory_space<vmem>>, %arg2: memref<96x32xbf16, #tpu.memory_space<vmem>>, %arg3: memref<1x32xf32, #tpu.memory_space<vmem>>, %arg4: memref<1x32xf32, #tpu.memory_space<vmem>>, %arg5: memref<1x32xf32, #tpu.memory_space<vmem>>, %arg6: memref<3x32x32xbf16, #tpu.memory_space<vmem>>, %arg7: memref<1x32xf32, #tpu.memory_space<vmem>>, %arg8: memref<1x32xf32, #tpu.memory_space<vmem>>, %arg9: memref<1x32xf32, #tpu.memory_space<vmem>>, %arg10: memref<1x32xf32, #tpu.memory_space<vmem>>, %arg11: memref<16x16xbf16, #tpu.memory_space<vmem>>, %arg12: memref<16x16xbf16, #tpu.memory_space<vmem>>, %arg13: memref<1xf32, #tpu.memory_space<smem>>, %arg14: memref<2x8xf32, #tpu.memory_space<vmem>>) attributes {dimension_semantics = [#tpu.dimension_semantics<parallel>], iteration_bounds = array<i64: 1>, scalar_prefetch = 0 : i64, scratch_operands = 0 : i64, tpu.core_type = #tpu.core_type<tc>, window_params = [{transform_indices = @transform_0, window_bounds = array<i64: 16, 96>}, {pipeline_mode = #tpu.pipeline_mode<synchronous>, transform_indices = @transform_1, window_bounds = array<i64: 96, 32>}, {pipeline_mode = #tpu.pipeline_mode<synchronous>, transform_indices = @transform_2, window_bounds = array<i64: 1, 32>}, {pipeline_mode = #tpu.pipeline_mode<synchronous>, transform_indices = @transform_3, window_bounds = array<i64: 1, 32>}, {pipeline_mode = #tpu.pipeline_mode<synchronous>, transform_indices = @transform_4, window_bounds = array<i64: 1, 32>}, {pipeline_mode = #tpu.pipeline_mode<synchronous>, transform_indices = @transform_5, window_bounds = array<i64: 3, 32, 32>}, {pipeline_mode = #tpu.pipeline_mode<synchronous>, transform_indices = @transform_6, window_bounds = array<i64: 1, 32>}, {pipeline_mode = #tpu.pipeline_mode<synchronous>, transform_indices = @transform_7, window_bounds = array<i64: 1, 32>}, {pipeline_mode = #tpu.pipeline_mode<synchronous>, transform_indices = @transform_8, window_bounds = array<i64: 1, 32>}, {pipeline_mode = #tpu.pipeline_mode<synchronous>, transform_indices = @transform_9, window_bounds = array<i64: 1, 32>}, {pipeline_mode = #tpu.pipeline_mode<synchronous>, transform_indices = @transform_10, window_bounds = array<i64: 16, 16>}, {pipeline_mode = #tpu.pipeline_mode<synchronous>, transform_indices = @transform_11, window_bounds = array<i64: 16, 16>}, {transform_indices = @transform_12, window_bounds = array<i64: 1>}, {transform_indices = @transform_13, window_bounds = array<i64: 2, 8>}]} {
    %c0 = arith.constant 0 : index
    %c0_0 = arith.constant 0 : index
    %0 = vector.load %arg1[%c0, %c0_0] : memref<16x96xbf16, #tpu.memory_space<vmem>>, vector<16x96xbf16>
    %c0_1 = arith.constant 0 : index
    %c0_2 = arith.constant 0 : index
    %1 = vector.load %arg2[%c0_1, %c0_2] : memref<96x32xbf16, #tpu.memory_space<vmem>>, vector<96x32xbf16>
    %cst = arith.constant dense<0.000000e+00> : vector<16x32xf32>
    %2 = tpu.matmul %0, %1, %cst {dimension_numbers = #tpu.dot_dimension_numbers<[1], [0], [0], [1], [0, 0, 1, 1], [], []>} : vector<16x96xbf16>, vector<96x32xbf16>, vector<16x32xf32> -> vector<16x32xf32>
    %c0_3 = arith.constant 0 : index
    %c0_4 = arith.constant 0 : index
    %3 = vector.load %arg3[%c0_3, %c0_4] : memref<1x32xf32, #tpu.memory_space<vmem>>, vector<1x32xf32>
    %4 = vector.broadcast %3 : vector<1x32xf32> to vector<16x32xf32>
    %5 = arith.addf %2, %4 : vector<16x32xf32>
    %cst_5 = arith.constant dense<0.000000e+00> : vector<16xf32>
    %6 = vector.multi_reduction <add>, %5, %cst_5 [1] : vector<16x32xf32> to vector<16xf32>
    %7 = vector.shape_cast %6 : vector<16xf32> to vector<16x1xf32>
    %cst_6 = arith.constant 3.200000e+01 : f32
    %8 = vector.broadcast %cst_6 : f32 to vector<16x1xf32>
    %9 = arith.divf %7, %8 : vector<16x1xf32>
    %10 = arith.mulf %5, %5 : vector<16x32xf32>
    %cst_7 = arith.constant dense<0.000000e+00> : vector<16xf32>
    %11 = vector.multi_reduction <add>, %10, %cst_7 [1] : vector<16x32xf32> to vector<16xf32>
    %12 = vector.shape_cast %11 : vector<16xf32> to vector<16x1xf32>
    %cst_8 = arith.constant 3.200000e+01 : f32
    %13 = vector.broadcast %cst_8 : f32 to vector<16x1xf32>
    %14 = arith.divf %12, %13 : vector<16x1xf32>
    %15 = arith.mulf %9, %9 : vector<16x1xf32>
    %16 = arith.subf %14, %15 : vector<16x1xf32>
    %17 = vector.broadcast %9 : vector<16x1xf32> to vector<16x32xf32>
    %18 = arith.subf %5, %17 : vector<16x32xf32>
    %cst_9 = arith.constant 9.99999974E-6 : f32
    %19 = vector.broadcast %cst_9 : f32 to vector<16x1xf32>
    %20 = arith.addf %16, %19 : vector<16x1xf32>
    %21 = math.rsqrt %20 : vector<16x1xf32>
    %22 = vector.broadcast %21 : vector<16x1xf32> to vector<16x32xf32>
    %23 = arith.mulf %18, %22 : vector<16x32xf32>
    %c0_10 = arith.constant 0 : index
    %c0_11 = arith.constant 0 : index
    %24 = vector.load %arg4[%c0_10, %c0_11] : memref<1x32xf32, #tpu.memory_space<vmem>>, vector<1x32xf32>
    %25 = vector.broadcast %24 : vector<1x32xf32> to vector<16x32xf32>
    %26 = arith.mulf %23, %25 : vector<16x32xf32>
    %c0_12 = arith.constant 0 : index
    %c0_13 = arith.constant 0 : index
    %27 = vector.load %arg5[%c0_12, %c0_13] : memref<1x32xf32, #tpu.memory_space<vmem>>, vector<1x32xf32>
    %28 = vector.broadcast %27 : vector<1x32xf32> to vector<16x32xf32>
    %29 = arith.addf %26, %28 : vector<16x32xf32>
    %cst_14 = arith.constant 0.000000e+00 : f32
    %30 = vector.broadcast %cst_14 : f32 to vector<16x32xf32>
    %31 = arith.maximumf %29, %30 : vector<16x32xf32>
    %32 = arith.truncf %31 : vector<16x32xf32> to vector<16x32xbf16>
    %c0_15 = arith.constant 0 : index
    %c0_16 = arith.constant 0 : index
    %33 = vector.load %arg11[%c0_15, %c0_16] : memref<16x16xbf16, #tpu.memory_space<vmem>>, vector<16x16xbf16>
    %cst_17 = arith.constant dense<0.000000e+00> : vector<16x32xf32>
    %34 = tpu.matmul %33, %32, %cst_17 {dimension_numbers = #tpu.dot_dimension_numbers<[1], [0], [0], [1], [0, 0, 1, 1], [], []>} : vector<16x16xbf16>, vector<16x32xbf16>, vector<16x32xf32> -> vector<16x32xf32>
    %c0_18 = arith.constant 0 : index
    %c0_19 = arith.constant 0 : index
    %35 = vector.load %arg12[%c0_18, %c0_19] : memref<16x16xbf16, #tpu.memory_space<vmem>>, vector<16x16xbf16>
    %cst_20 = arith.constant dense<0.000000e+00> : vector<16x32xf32>
    %36 = tpu.matmul %35, %32, %cst_20 {dimension_numbers = #tpu.dot_dimension_numbers<[1], [0], [0], [1], [0, 0, 1, 1], [], []>} : vector<16x16xbf16>, vector<16x32xbf16>, vector<16x32xf32> -> vector<16x32xf32>
    %37 = arith.truncf %34 : vector<16x32xf32> to vector<16x32xbf16>
    %c0_21 = arith.constant 0 : index
    %c0_22 = arith.constant 0 : index
    %c0_23 = arith.constant 0 : index
    %38 = vector.load %arg6[%c0_21, %c0_22, %c0_23] : memref<3x32x32xbf16, #tpu.memory_space<vmem>>, vector<1x32x32xbf16>
    %39 = vector.shape_cast %38 : vector<1x32x32xbf16> to vector<32x32xbf16>
    %cst_24 = arith.constant dense<0.000000e+00> : vector<16x32xf32>
    %40 = tpu.matmul %37, %39, %cst_24 {dimension_numbers = #tpu.dot_dimension_numbers<[1], [0], [0], [1], [0, 0, 1, 1], [], []>} : vector<16x32xbf16>, vector<32x32xbf16>, vector<16x32xf32> -> vector<16x32xf32>
    %c1 = arith.constant 1 : index
    %c0_25 = arith.constant 0 : index
    %c0_26 = arith.constant 0 : index
    %41 = vector.load %arg6[%c1, %c0_25, %c0_26] : memref<3x32x32xbf16, #tpu.memory_space<vmem>>, vector<1x32x32xbf16>
    %42 = vector.shape_cast %41 : vector<1x32x32xbf16> to vector<32x32xbf16>
    %cst_27 = arith.constant dense<0.000000e+00> : vector<16x32xf32>
    %43 = tpu.matmul %32, %42, %cst_27 {dimension_numbers = #tpu.dot_dimension_numbers<[1], [0], [0], [1], [0, 0, 1, 1], [], []>} : vector<16x32xbf16>, vector<32x32xbf16>, vector<16x32xf32> -> vector<16x32xf32>
    %44 = arith.addf %40, %43 : vector<16x32xf32>
    %45 = arith.truncf %36 : vector<16x32xf32> to vector<16x32xbf16>
    %c2 = arith.constant 2 : index
    %c0_28 = arith.constant 0 : index
    %c0_29 = arith.constant 0 : index
    %46 = vector.load %arg6[%c2, %c0_28, %c0_29] : memref<3x32x32xbf16, #tpu.memory_space<vmem>>, vector<1x32x32xbf16>
    %47 = vector.shape_cast %46 : vector<1x32x32xbf16> to vector<32x32xbf16>
    %cst_30 = arith.constant dense<0.000000e+00> : vector<16x32xf32>
    %48 = tpu.matmul %45, %47, %cst_30 {dimension_numbers = #tpu.dot_dimension_numbers<[1], [0], [0], [1], [0, 0, 1, 1], [], []>} : vector<16x32xbf16>, vector<32x32xbf16>, vector<16x32xf32> -> vector<16x32xf32>
    %49 = arith.addf %44, %48 : vector<16x32xf32>
    %c0_31 = arith.constant 0 : index
    %c0_32 = arith.constant 0 : index
    %50 = vector.load %arg7[%c0_31, %c0_32] : memref<1x32xf32, #tpu.memory_space<vmem>>, vector<1x32xf32>
    %51 = vector.broadcast %50 : vector<1x32xf32> to vector<16x32xf32>
    %52 = arith.addf %49, %51 : vector<16x32xf32>
    %cst_33 = arith.constant dense<0.000000e+00> : vector<16xf32>
    %53 = vector.multi_reduction <add>, %52, %cst_33 [1] : vector<16x32xf32> to vector<16xf32>
    %54 = vector.shape_cast %53 : vector<16xf32> to vector<16x1xf32>
    %cst_34 = arith.constant 3.200000e+01 : f32
    %55 = vector.broadcast %cst_34 : f32 to vector<16x1xf32>
    %56 = arith.divf %54, %55 : vector<16x1xf32>
    %57 = arith.mulf %52, %52 : vector<16x32xf32>
    %cst_35 = arith.constant dense<0.000000e+00> : vector<16xf32>
    %58 = vector.multi_reduction <add>, %57, %cst_35 [1] : vector<16x32xf32> to vector<16xf32>
    %59 = vector.shape_cast %58 : vector<16xf32> to vector<16x1xf32>
    %cst_36 = arith.constant 3.200000e+01 : f32
    %60 = vector.broadcast %cst_36 : f32 to vector<16x1xf32>
    %61 = arith.divf %59, %60 : vector<16x1xf32>
    %62 = arith.mulf %56, %56 : vector<16x1xf32>
    %63 = arith.subf %61, %62 : vector<16x1xf32>
    %64 = vector.broadcast %56 : vector<16x1xf32> to vector<16x32xf32>
    %65 = arith.subf %52, %64 : vector<16x32xf32>
    %cst_37 = arith.constant 9.99999974E-6 : f32
    %66 = vector.broadcast %cst_37 : f32 to vector<16x1xf32>
    %67 = arith.addf %63, %66 : vector<16x1xf32>
    %68 = math.rsqrt %67 : vector<16x1xf32>
    %69 = vector.broadcast %68 : vector<16x1xf32> to vector<16x32xf32>
    %70 = arith.mulf %65, %69 : vector<16x32xf32>
    %c0_38 = arith.constant 0 : index
    %c0_39 = arith.constant 0 : index
    %71 = vector.load %arg8[%c0_38, %c0_39] : memref<1x32xf32, #tpu.memory_space<vmem>>, vector<1x32xf32>
    %72 = vector.broadcast %71 : vector<1x32xf32> to vector<16x32xf32>
    %73 = arith.mulf %70, %72 : vector<16x32xf32>
    %c0_40 = arith.constant 0 : index
    %c0_41 = arith.constant 0 : index
    %74 = vector.load %arg9[%c0_40, %c0_41] : memref<1x32xf32, #tpu.memory_space<vmem>>, vector<1x32xf32>
    %75 = vector.broadcast %74 : vector<1x32xf32> to vector<16x32xf32>
    %76 = arith.addf %73, %75 : vector<16x32xf32>
    %cst_42 = arith.constant 0.000000e+00 : f32
    %77 = vector.broadcast %cst_42 : f32 to vector<16x32xf32>
    %78 = arith.maximumf %76, %77 : vector<16x32xf32>
    %c0_43 = arith.constant 0 : index
    %c0_44 = arith.constant 0 : index
    %79 = vector.load %arg10[%c0_43, %c0_44] : memref<1x32xf32, #tpu.memory_space<vmem>>, vector<1x32xf32>
    %80 = vector.broadcast %79 : vector<1x32xf32> to vector<16x32xf32>
    %81 = arith.mulf %78, %80 : vector<16x32xf32>
    %82 = vector.shape_cast %81 : vector<16x32xf32> to vector<2x8x32xf32>
    %cst_45 = arith.constant dense<0.000000e+00> : vector<2x8xf32>
    %83 = vector.multi_reduction <add>, %82, %cst_45 [2] : vector<2x8x32xf32> to vector<2x8xf32>
    %c0_46 = arith.constant 0 : index
    %84 = memref.load %arg13[%c0_46] : memref<1xf32, #tpu.memory_space<smem>>
    %85 = vector.broadcast %84 : f32 to vector<2x8xf32>
    %86 = arith.addf %83, %85 : vector<2x8xf32>
    %cst_47 = arith.constant 0.000000e+00 : f32
    %87 = vector.broadcast %cst_47 : f32 to vector<2x8xf32>
    %88 = arith.maximumf %86, %87 : vector<2x8xf32>
    %c0_48 = arith.constant 0 : index
    %c0_49 = arith.constant 0 : index
    %89 = vector.load %arg14[%c0_48, %c0_49] : memref<2x8xf32, #tpu.memory_space<vmem>>, vector<2x8xf32>
    tpu.vector_store %arg14[%c0_48, %c0_49], %88 {strides = array<i32>} : memref<2x8xf32, #tpu.memory_space<vmem>>, vector<2x8xf32>,
    return
  }
  func.func @transform_0(%arg0: i32) -> (i32, i32) {
    %c0_i32 = arith.constant 0 : i32
    %c0_i32_0 = arith.constant 0 : i32
    return %arg0, %c0_i32 : i32, i32
  }
  func.func @transform_1(%arg0: i32) -> (i32, i32) {
    %c0_i32 = arith.constant 0 : i32
    %c0_i32_0 = arith.constant 0 : i32
    %c0_i32_1 = arith.constant 0 : i32
    return %c0_i32, %c0_i32_0 : i32, i32
  }
  func.func @transform_2(%arg0: i32) -> (i32, i32) {
    %c0_i32 = arith.constant 0 : i32
    %c0_i32_0 = arith.constant 0 : i32
    %c0_i32_1 = arith.constant 0 : i32
    return %c0_i32, %c0_i32_0 : i32, i32
  }
  func.func @transform_3(%arg0: i32) -> (i32, i32) {
    %c0_i32 = arith.constant 0 : i32
    %c0_i32_0 = arith.constant 0 : i32
    %c0_i32_1 = arith.constant 0 : i32
    return %c0_i32, %c0_i32_0 : i32, i32
  }
  func.func @transform_4(%arg0: i32) -> (i32, i32) {
    %c0_i32 = arith.constant 0 : i32
    %c0_i32_0 = arith.constant 0 : i32
    %c0_i32_1 = arith.constant 0 : i32
    return %c0_i32, %c0_i32_0 : i32, i32
  }
  func.func @transform_5(%arg0: i32) -> (i32, i32, i32) {
    %c0_i32 = arith.constant 0 : i32
    %c0_i32_0 = arith.constant 0 : i32
    %c0_i32_1 = arith.constant 0 : i32
    %c0_i32_2 = arith.constant 0 : i32
    return %c0_i32, %c0_i32_0, %c0_i32_1 : i32, i32, i32
  }
  func.func @transform_6(%arg0: i32) -> (i32, i32) {
    %c0_i32 = arith.constant 0 : i32
    %c0_i32_0 = arith.constant 0 : i32
    %c0_i32_1 = arith.constant 0 : i32
    return %c0_i32, %c0_i32_0 : i32, i32
  }
  func.func @transform_7(%arg0: i32) -> (i32, i32) {
    %c0_i32 = arith.constant 0 : i32
    %c0_i32_0 = arith.constant 0 : i32
    %c0_i32_1 = arith.constant 0 : i32
    return %c0_i32, %c0_i32_0 : i32, i32
  }
  func.func @transform_8(%arg0: i32) -> (i32, i32) {
    %c0_i32 = arith.constant 0 : i32
    %c0_i32_0 = arith.constant 0 : i32
    %c0_i32_1 = arith.constant 0 : i32
    return %c0_i32, %c0_i32_0 : i32, i32
  }
  func.func @transform_9(%arg0: i32) -> (i32, i32) {
    %c0_i32 = arith.constant 0 : i32
    %c0_i32_0 = arith.constant 0 : i32
    %c0_i32_1 = arith.constant 0 : i32
    return %c0_i32, %c0_i32_0 : i32, i32
  }
  func.func @transform_10(%arg0: i32) -> (i32, i32) {
    %c0_i32 = arith.constant 0 : i32
    %c0_i32_0 = arith.constant 0 : i32
    %c0_i32_1 = arith.constant 0 : i32
    return %c0_i32, %c0_i32_0 : i32, i32
  }
  func.func @transform_11(%arg0: i32) -> (i32, i32) {
    %c0_i32 = arith.constant 0 : i32
    %c0_i32_0 = arith.constant 0 : i32
    %c0_i32_1 = arith.constant 0 : i32
    return %c0_i32, %c0_i32_0 : i32, i32
  }
  func.func @transform_12(%arg0: i32) -> i32 {
    %c0_i32 = arith.constant 0 : i32
    %c0_i32_0 = arith.constant 0 : i32
    return %c0_i32 : i32
  }
  func.func @transform_13(%arg0: i32) -> (i32, i32) {
    %c0_i32 = arith.constant 0 : i32
    %c0_i32_0 = arith.constant 0 : i32
    return %arg0, %c0_i32 : i32, i32
  }
}

</mosaic_0001>

<llo_original>
// kernel: tpu_custom_call.1
$region0: #{tpu_custom_call.1}
  #allocation0 [shape = 'u32[]', space=smem, size = 0x4, offset = 0x4, fixed_abs, tag = 'smem constant byte address 0x4 - core index']
  #allocation1 [shape = 'u32[72,128]{1,0:T(1,128)}', space=vmem, size = 0x9000, scoped, tag = 'internal scratch']
  #allocation2 [shape = 'f32[1]{0:T(128)S(6)}', space=smem, size = 0x200, scoped, tag = 'scoped memory for tpu_custom_call.1']
  %s0 = inlined_call_operand.vmem [shape: bf16[16,96], index: 0, kind: input, shape index: {}]
  %s1 = inlined_call_operand.vmem [shape: bf16[96,32], index: 1, kind: input, shape index: {}]
  %s2 = inlined_call_operand.hbm [shape: f32[1,32], index: 2, kind: input, shape index: {}]
  %s3 = inlined_call_operand.hbm [shape: f32[1,32], index: 3, kind: input, shape index: {}]
  %s4 = inlined_call_operand.hbm [shape: f32[1,32], index: 4, kind: input, shape index: {}]
  %s5 = inlined_call_operand.vmem [shape: bf16[3,32,32], index: 5, kind: input, shape index: {}]
  %s6 = inlined_call_operand.hbm [shape: f32[1,32], index: 6, kind: input, shape index: {}]
  %s7 = inlined_call_operand.hbm [shape: f32[1,32], index: 7, kind: input, shape index: {}]
  %s8 = inlined_call_operand.vmem [shape: f32[1,32], index: 8, kind: input, shape index: {}]
  %s9 = inlined_call_operand.vmem [shape: f32[1,32], index: 9, kind: input, shape index: {}]
  %s10 = inlined_call_operand.vmem [shape: bf16[16,16], index: 10, kind: input, shape index: {}]
  %s11 = inlined_call_operand.vmem [shape: bf16[16,16], index: 11, kind: input, shape index: {}]
  %s12 = inlined_call_operand.<no memory space> [shape: f32[1], index: 12, kind: input, shape index: {}]
  %s13 = inlined_call_operand.hbm [shape: f32[2,8], index: 13, kind: output, shape index: {}]
  %s14 = sld [smem:[#allocation0]]
  $region82: #{tpu_custom_call.1} parent=0
    _
  %s16 = ssub.s32 1, %s14
  %s17 = scalar_select 0, %s16, %s14
  %18 = sst [smem:[#allocation2]] %s12
  $region1: #{tpu_custom_call.1} parent=0
    #allocation3 [shape = 'u8[512]{0}', space=vmem, size = 0x400, scoped, tag = 'input window, operand 2, single buffered']
    #allocation4 [shape = 's32[1]{0}', space=sflag, size = 0x4, scoped, tag = 'scoped memory for tpu_custom_call.1']
    #allocation5 [shape = 's32[1]{0}', space=sflag, size = 0x4, scoped, tag = 'scoped memory for tpu_custom_call.1']
    #allocation6 [shape = 'u8[512]{0}', space=vmem, size = 0x400, scoped, tag = 'input window, operand 3, single buffered']
    #allocation7 [shape = 's32[1]{0}', space=sflag, size = 0x4, scoped, tag = 'scoped memory for tpu_custom_call.1']
    #allocation8 [shape = 'u8[512]{0}', space=vmem, size = 0x400, scoped, tag = 'input window, operand 4, single buffered']
    #allocation9 [shape = 'u8[512]{0}', space=vmem, size = 0x400, scoped, tag = 'input window, operand 6, single buffered']
    #allocation10 [shape = 's32[1]{0}', space=sflag, size = 0x4, scoped, tag = 'scoped memory for tpu_custom_call.1']
    #allocation11 [shape = 'u8[512]{0}', space=vmem, size = 0x400, scoped, tag = 'input window, operand 7, single buffered']
    #allocation12 [shape = 'u8[1024]{0}', space=vmem, size = 0x400, scoped, tag = 'output window, operand 0, single buffered']
    %19 = vsyncpa [#allocation4], 0
    %20 = vsyncpa [#allocation7], 0
    %21 = vsyncpa [#allocation10], 0
    %22 = vsyncpa [#allocation5], 0
    // Predicated region
    $region2: #{tpu_custom_call.1} parent=1 // pred_check
      _
    $region3: #{tpu_custom_call.1} parent=1 // pred_check_branch
      %24 = sbr.rel (0) target = $region5
    $region4: #{tpu_custom_call.1} parent=1 // pred_region
      _
    $region5: #{tpu_custom_call.1} parent=1 // pred_fallthru
      _
    // Predicated region
    $region6: #{tpu_custom_call.1} parent=1 // pred_check
      _
    $region7: #{tpu_custom_call.1} parent=1 // pred_check_branch
      %26 = sbr.rel (0) target = $region9
    $region8: #{tpu_custom_call.1} parent=1 // pred_region
      _
    $region9: #{tpu_custom_call.1} parent=1 // pred_fallthru
      _
    // Predicated region
    $region10: #{tpu_custom_call.1} parent=1 // pred_check
      _
    $region11: #{tpu_custom_call.1} parent=1 // pred_check_branch
      %28 = sbr.rel (0) target = $region13
    $region12: #{tpu_custom_call.1} parent=1 // pred_region
      %30 = vsyncadd [#allocation4], 0
      %s32 = sshll.u32 %s2, 4
      %s33 = int_to_ptr.hbm [resolvable:$true] %s32
      %s34 = sshll.u32 [#allocation3], 4
      %s35 = int_to_ptr.vmem [resolvable:$true] %s34
      %37 = dma.hbm_to_vmem [thread:$0]  %s33, 16, %s35, [#allocation4]
    $region13: #{tpu_custom_call.1} parent=1 // pred_fallthru
      _
    // Predicated region
    $region14: #{tpu_custom_call.1} parent=1 // pred_check
      _
    $region15: #{tpu_custom_call.1} parent=1 // pred_check_branch
      %39 = sbr.rel (0) target = $region17
    $region16: #{tpu_custom_call.1} parent=1 // pred_region
      %41 = vsyncadd [#allocation7], 0
      %s43 = sshll.u32 %s3, 4
      %s44 = int_to_ptr.hbm [resolvable:$true] %s43
      %s45 = sshll.u32 [#allocation6], 4
      %s46 = int_to_ptr.vmem [resolvable:$true] %s45
      %48 = dma.hbm_to_vmem [thread:$0]  %s44, 16, %s46, [#allocation7]
    $region17: #{tpu_custom_call.1} parent=1 // pred_fallthru
      _
    // Predicated region
    $region18: #{tpu_custom_call.1} parent=1 // pred_check
      _
    $region19: #{tpu_custom_call.1} parent=1 // pred_check_branch
      %50 = sbr.rel (0) target = $region21
    $region20: #{tpu_custom_call.1} parent=1 // pred_region
      %52 = vsyncadd [#allocation7], 0
      %s54 = sshll.u32 %s4, 4
      %s55 = int_to_ptr.hbm [resolvable:$true] %s54
      %s56 = sshll.u32 [#allocation8], 4
      %s57 = int_to_ptr.vmem [resolvable:$true] %s56
      %59 = dma.hbm_to_vmem [thread:$0]  %s55, 16, %s57, [#allocation7]
    $region21: #{tpu_custom_call.1} parent=1 // pred_fallthru
      _
    // Predicated region
    $region22: #{tpu_custom_call.1} parent=1 // pred_check
      _
    $region23: #{tpu_custom_call.1} parent=1 // pred_check_branch
      %61 = sbr.rel (0) target = $region25
    $region24: #{tpu_custom_call.1} parent=1 // pred_region
      _
    $region25: #{tpu_custom_call.1} parent=1 // pred_fallthru
      _
    // Predicated region
    $region26: #{tpu_custom_call.1} parent=1 // pred_check
      _
    $region27: #{tpu_custom_call.1} parent=1 // pred_check_branch
      %63 = sbr.rel (0) target = $region29
    $region28: #{tpu_custom_call.1} parent=1 // pred_region
      %65 = vsyncadd [#allocation10], 0
      %s67 = sshll.u32 %s6, 4
      %s68 = int_to_ptr.hbm [resolvable:$true] %s67
      %s69 = sshll.u32 [#allocation9], 4
      %s70 = int_to_ptr.vmem [resolvable:$true] %s69
      %72 = dma.hbm_to_vmem [thread:$0]  %s68, 16, %s70, [#allocation10]
    $region29: #{tpu_custom_call.1} parent=1 // pred_fallthru
      _
    // Predicated region
    $region30: #{tpu_custom_call.1} parent=1 // pred_check
      _
    $region31: #{tpu_custom_call.1} parent=1 // pred_check_branch
      %74 = sbr.rel (0) target = $region33
    $region32: #{tpu_custom_call.1} parent=1 // pred_region
      %76 = vsyncadd [#allocation10], 0
      %s78 = sshll.u32 %s7, 4
      %s79 = int_to_ptr.hbm [resolvable:$true] %s78
      %s80 = sshll.u32 [#allocation11], 4
      %s81 = int_to_ptr.vmem [resolvable:$true] %s80
      %83 = dma.hbm_to_vmem [thread:$0]  %s79, 16, %s81, [#allocation10]
    $region33: #{tpu_custom_call.1} parent=1 // pred_fallthru
      _
    // Predicated region
    $region34: #{tpu_custom_call.1} parent=1 // pred_check
      _
    $region35: #{tpu_custom_call.1} parent=1 // pred_check_branch
      %85 = sbr.rel (0) target = $region37
    $region36: #{tpu_custom_call.1} parent=1 // pred_region
      _
    $region37: #{tpu_custom_call.1} parent=1 // pred_fallthru
      _
    // Predicated region
    $region38: #{tpu_custom_call.1} parent=1 // pred_check
      _
    $region39: #{tpu_custom_call.1} parent=1 // pred_check_branch
      %87 = sbr.rel (0) target = $region41
    $region40: #{tpu_custom_call.1} parent=1 // pred_region
      _
    $region41: #{tpu_custom_call.1} parent=1 // pred_fallthru
      _
    // Predicated region
    $region42: #{tpu_custom_call.1} parent=1 // pred_check
      _
    $region43: #{tpu_custom_call.1} parent=1 // pred_check_branch
      %89 = sbr.rel (0) target = $region45
    $region44: #{tpu_custom_call.1} parent=1 // pred_region
      _
    $region45: #{tpu_custom_call.1} parent=1 // pred_fallthru
      _
    // Predicated region
    $region46: #{tpu_custom_call.1} parent=1 // pred_check
      _
    $region47: #{tpu_custom_call.1} parent=1 // pred_check_branch
      %91 = sbr.rel (0) target = $region49
    $region48: #{tpu_custom_call.1} parent=1 // pred_region
      _
    $region49: #{tpu_custom_call.1} parent=1 // pred_fallthru
      _
    // Predicated region
    $region50: #{tpu_custom_call.1} parent=1 // pred_check
      _
    $region51: #{tpu_custom_call.1} parent=1 // pred_check_branch
      %93 = sbr.rel (0) target = $region53
    $region52: #{tpu_custom_call.1} parent=1 // pred_region
      _
    $region53: #{tpu_custom_call.1} parent=1 // pred_fallthru
      _
    // Predicated region
    $region54: #{tpu_custom_call.1} parent=1 // pred_check
      _
    $region55: #{tpu_custom_call.1} parent=1 // pred_check_branch
      %95 = sbr.rel (0) target = $region57
    $region56: #{tpu_custom_call.1} parent=1 // pred_region
      %97 = dma.done [#allocation4], 16
    $region57: #{tpu_custom_call.1} parent=1 // pred_fallthru
      _
    // Predicated region
    $region58: #{tpu_custom_call.1} parent=1 // pred_check
      _
    $region59: #{tpu_custom_call.1} parent=1 // pred_check_branch
      %99 = sbr.rel (0) target = $region61
    $region60: #{tpu_custom_call.1} parent=1 // pred_region
      %101 = dma.done [#allocation7], 16
    $region61: #{tpu_custom_call.1} parent=1 // pred_fallthru
      _
    // Predicated region
    $region62: #{tpu_custom_call.1} parent=1 // pred_check
      _
    $region63: #{tpu_custom_call.1} parent=1 // pred_check_branch
      %103 = sbr.rel (0) target = $region65
    $region64: #{tpu_custom_call.1} parent=1 // pred_region
      %105 = dma.done [#allocation7], 16
    $region65: #{tpu_custom_call.1} parent=1 // pred_fallthru
      _
    // Predicated region
    $region66: #{tpu_custom_call.1} parent=1 // pred_check
      _
    $region67: #{tpu_custom_call.1} parent=1 // pred_check_branch
      %107 = sbr.rel (0) target = $region69
    $region68: #{tpu_custom_call.1} parent=1 // pred_region
      %109 = dma.done [#allocation10], 16
    $region69: #{tpu_custom_call.1} parent=1 // pred_fallthru
      _
    // Predicated region
    $region70: #{tpu_custom_call.1} parent=1 // pred_check
      _
    $region71: #{tpu_custom_call.1} parent=1 // pred_check_branch
      %111 = sbr.rel (0) target = $region73
    $region72: #{tpu_custom_call.1} parent=1 // pred_region
      %113 = dma.done [#allocation10], 16
    $region73: #{tpu_custom_call.1} parent=1 // pred_fallthru
      _
    %v115 = vld [vmem:[%s0] sm:$0xf]
    %v116 = vld [vmem:[%s0 + $0x4] sm:$0xf]
    %v117 = vld [vmem:[%s1] sm:$0xf]
    %v118 = vld [vmem:[%s1 + $0x4] sm:$0xf]
    %v119 = vld [vmem:[%s1 + $0x8] sm:$0xf]
    %v120 = vld [vmem:[%s1 + $0xc] sm:$0xf]
    %v121 = vld [vmem:[%s1 + $0x10] sm:$0xf]
    %v122 = vld [vmem:[%s1 + $0x14] sm:$0xf]
    %v123 = vld [vmem:[%s1 + $0x18] sm:$0xf]
    %v124 = vld [vmem:[%s1 + $0x1c] sm:$0xf]
    %v125 = vld [vmem:[%s1 + $0x20] sm:$0xf]
    %v126 = vld [vmem:[%s1 + $0x24] sm:$0xf]
    %v127 = vld [vmem:[%s1 + $0x28] sm:$0xf]
    %v128 = vld [vmem:[%s1 + $0x2c] sm:$0xf]
    %v129 = vld [vmem:[#allocation3] sm:$0x1]
    %v131 = vperm.slane %v129, 0
    %v135 = vunpack.c.l.b16 %v115
    %v136 = vunpack.c.l.b16 %v116
    %v137 = vpack.c.b16 %v136, %v135
    %v150 = vunpack.c.l.b16 %v117
    %v151 = vunpack.c.l.b16 %v118
    %v152 = vunpack.c.l.b16 %v119
    %v153 = vunpack.c.l.b16 %v120
    %v154 = vunpack.c.l.b16 %v121
    %v155 = vunpack.c.l.b16 %v122
    %v156 = vunpack.c.l.b16 %v123
    %v157 = vunpack.c.l.b16 %v124
    %v158 = vunpack.c.l.b16 %v125
    %v159 = vunpack.c.l.b16 %v126
    %v160 = vunpack.c.l.b16 %v127
    %v161 = vunpack.c.l.b16 %v128
    %v162 = vpack.c.b16 %v151, %v150
    %v163 = vpack.c.b16 %v153, %v152
    %v164 = vpack.c.b16 %v155, %v154
    %v165 = vpack.c.b16 %v157, %v156
    %v166 = vpack.c.b16 %v159, %v158
    %v167 = vpack.c.b16 %v161, %v160
    %vm174 = vcmask 785408
    %v176 = vsel %vm174, %v137, 0
    %178 = vmatpush.bf16.msra.mxu0 0
    %179 = vmatpush.bf16.msra.mxu0 0
    %180 = vmatpush.bf16.msra.mxu0 %v167
    %181 = vmatpush.bf16.msra.mxu0 %v166
    %182 = vmatpush.bf16.msra.mxu0 %v165
    %183 = vmatpush.bf16.msra.mxu0 %v164
    %184 = vmatpush.bf16.msra.mxu0 %v163
    %185 = vmatpush.bf16.msra.mxu0 %v162
    %186 = vmatmul.bf16.gmra.mxu0 %v176
    %v187 = vpop.f32.mrf.mxu0
    %v188 = vadd.f32 %v131, %v187
    %v189 = vpop.f32.mrf.mxu0
    %v190 = vadd.f32 %v131, %v189
    %191 = vdwg.mxu0
    %vm192 = vcmask 261120
    %v193 = vsel %vm192, %v188, 0.0
    %194 = vadd.xlane.f32.xlu0 %v193
    %v195 = vpop.xlane.xlu0 %194
    %v196 = vsel %vm192, %v190, 0.0
    %197 = vadd.xlane.f32.xlu0 %v196
    %v198 = vpop.xlane.xlu0 %197
    %v199 = vrcp.pop 32.0
    %v200 = vmul.f32 32.0, %v199
    %v201 = vsub.f32 1.0, %v200
    %v202 = vmul.f32 %v199, %v201
    %v203 = vadd.f32 %v199, %v202
    %vm204 = vweird.f32 %v199
    %v205 = vsel %vm204, %v199, %v203
    %v206 = vmul.f32 %v195, %v205
    %v207 = vmul.f32 %v198, %v205
    %v208 = vmul.f32 %v188, %v188
    %v209 = vmul.f32 %v190, %v190
    %v210 = vsel %vm192, %v208, 0.0
    %211 = vadd.xlane.f32.xlu0 %v210
    %v212 = vpop.xlane.xlu0 %211
    %v213 = vsel %vm192, %v209, 0.0
    %214 = vadd.xlane.f32.xlu0 %v213
    %v215 = vpop.xlane.xlu0 %214
    %v216 = vmul.f32 %v212, %v205
    %v217 = vmul.f32 %v215, %v205
    %v218 = vmul.f32 %v206, %v206
    %v219 = vmul.f32 %v207, %v207
    %v220 = vsub.f32 %v216, %v218
    %v221 = vsub.f32 %v217, %v219
    %v222 = vsub.f32 %v188, %v206
    %v223 = vsub.f32 %v190, %v207
    %v224 = vadd.f32 %v220, 1e-05
    %v225 = vadd.f32 %v221, 1e-05
    %v226 = vrsqrt.pop %v224
    %v227 = vmul.f32 %v226, %v224
    %v228 = vmul.f32 %v227, %v226
    %v229 = vmul.f32 0.5, %v228
    %v230 = vsub.f32 1.5, %v229
    %v231 = vmul.f32 %v226, %v230
    %vm232 = vweird.f32 %v224
    %vm233 = vweird.f32 %v226
    %vm234 = vmor %vm232, %vm233
    %v235 = vsel %vm234, %v226, %v231
    %v236 = vrsqrt.pop %v225
    %v237 = vmul.f32 %v236, %v225
    %v238 = vmul.f32 %v237, %v236
    %v239 = vmul.f32 0.5, %v238
    %v240 = vsub.f32 1.5, %v239
    %v241 = vmul.f32 %v236, %v240
    %vm242 = vweird.f32 %v225
    %vm243 = vweird.f32 %v236
    %vm244 = vmor %vm242, %vm243
    %v245 = vsel %vm244, %v236, %v241
    %v246 = vmul.f32 %v222, %v235
    %v247 = vmul.f32 %v223, %v245
    %v248 = vld [vmem:[#allocation6] sm:$0x1]
    %v250 = vperm.slane %v248, 0
    %v252 = vmul.f32 %v246, %v250
    %v253 = vmul.f32 %v247, %v250
    %v254 = vld [vmem:[#allocation8] sm:$0x1]
    %v256 = vperm.slane %v254, 0
    %v258 = vadd.f32 %v252, %v256
    %v259 = vadd.f32 %v253, %v256
    %v260 = vmax.f32 %v258, 0.0
    %v261 = vmax.f32 %v259, 0.0
    %v262 = vpack.c.bf16 %v261, %v260
    %v263 = vld [vmem:[%s10] sm:$0xf]
    %v264 = vld [vmem:[%s10 + $0x4] sm:$0xf]
    %v267 = vunpack.c.l.b16 %v263
    %v268 = vunpack.c.l.b16 %v264
    %v269 = vpack.c.b16 %v268, %v267
    %vm270 = vcmask 130048
    %v272 = vsel %vm270, %v269, 0
    %274 = vmatpush.bf16.msra.mxu0 0
    %275 = vmatpush.bf16.msra.mxu0 0
    %276 = vmatpush.bf16.msra.mxu0 0
    %277 = vmatpush.bf16.msra.mxu0 0
    %278 = vmatpush.bf16.msra.mxu0 0
    %279 = vmatpush.bf16.msra.mxu0 0
    %280 = vmatpush.bf16.msra.mxu0 0
    %281 = vmatpush.bf16.msra.mxu0 %v262
    %282 = vmatmul.bf16.gmra.mxu0 %v272
    %v283 = vpop.f32.mrf.mxu0
    %v284 = vadd.f32 0.0, %v283
    %v285 = vpop.f32.mrf.mxu0
    %v286 = vadd.f32 0.0, %v285
    %287 = vdwg.mxu0
    %v288 = vld [vmem:[%s11] sm:$0xf]
    %v289 = vld [vmem:[%s11 + $0x4] sm:$0xf]
    %v292 = vunpack.c.l.b16 %v288
    %v293 = vunpack.c.l.b16 %v289
    %v294 = vpack.c.b16 %v293, %v292
    %v296 = vsel %vm270, %v294, 0
    %298 = vmatpush.bf16.msra.mxu0 0
    %299 = vmatpush.bf16.msra.mxu0 0
    %300 = vmatpush.bf16.msra.mxu0 0
    %301 = vmatpush.bf16.msra.mxu0 0
    %302 = vmatpush.bf16.msra.mxu0 0
    %303 = vmatpush.bf16.msra.mxu0 0
    %304 = vmatpush.bf16.msra.mxu0 0
    %305 = vmatpush.bf16.msra.mxu0 %v262
    %306 = vmatmul.bf16.gmra.mxu0 %v296
    %v307 = vpop.f32.mrf.mxu0
    %v308 = vadd.f32 0.0, %v307
    %v309 = vpop.f32.mrf.mxu0
    %v310 = vadd.f32 0.0, %v309
    %311 = vdwg.mxu0
    %v312 = vpack.c.bf16 %v286, %v284
    %v313 = vld [vmem:[%s5] sm:$0xf]
    %v314 = vld [vmem:[%s5 + $0x4] sm:$0xf]
    %v315 = vld [vmem:[%s5 + $0x8] sm:$0xf]
    %v316 = vld [vmem:[%s5 + $0xc] sm:$0xf]
    %s317 = scalar_lea.vmem %s5, 16
    %v318 = vld [vmem:[%s317] sm:$0xf]
    %v319 = vld [vmem:[%s317 + $0x4] sm:$0xf]
    %v320 = vld [vmem:[%s317 + $0x8] sm:$0xf]
    %v321 = vld [vmem:[%s317 + $0xc] sm:$0xf]
    %v326 = vunpack.c.l.b16 %v318
    %v327 = vunpack.c.l.b16 %v319
    %v328 = vunpack.c.l.b16 %v320
    %v329 = vunpack.c.l.b16 %v321
    %v330 = vpack.c.b16 %v327, %v326
    %v331 = vpack.c.b16 %v329, %v328
    %v335 = vsel %vm192, %v262, 0
    %337 = vmatpush.bf16.msra.mxu0 0
    %338 = vmatpush.bf16.msra.mxu0 0
    %339 = vmatpush.bf16.msra.mxu0 0
    %340 = vmatpush.bf16.msra.mxu0 0
    %341 = vmatpush.bf16.msra.mxu0 0
    %342 = vmatpush.bf16.msra.mxu0 0
    %343 = vmatpush.bf16.msra.mxu0 %v331
    %344 = vmatpush.bf16.msra.mxu0 %v330
    %345 = vmatmul.bf16.gmra.mxu0 %v335
    %v346 = vpop.f32.mrf.mxu0
    %v347 = vadd.f32 0.0, %v346
    %v348 = vpop.f32.mrf.mxu0
    %v349 = vadd.f32 0.0, %v348
    %350 = vdwg.mxu0
    %v355 = vunpack.c.l.b16 %v313
    %v356 = vunpack.c.l.b16 %v314
    %v357 = vunpack.c.l.b16 %v315
    %v358 = vunpack.c.l.b16 %v316
    %v359 = vpack.c.b16 %v356, %v355
    %v360 = vpack.c.b16 %v358, %v357
    %v364 = vsel %vm192, %v312, 0
    %366 = vmatpush.bf16.msra.mxu0 0
    %367 = vmatpush.bf16.msra.mxu0 0
    %368 = vmatpush.bf16.msra.mxu0 0
    %369 = vmatpush.bf16.msra.mxu0 0
    %370 = vmatpush.bf16.msra.mxu0 0
    %371 = vmatpush.bf16.msra.mxu0 0
    %372 = vmatpush.bf16.msra.mxu0 %v360
    %373 = vmatpush.bf16.msra.mxu0 %v359
    %374 = vmatmul.bf16.gmra.mxu0 %v364
    %v375 = vpop.f32.mrf.mxu0
    %v376 = vadd.f32 %v347, %v375
    %v377 = vpop.f32.mrf.mxu0
    %v378 = vadd.f32 %v349, %v377
    %379 = vdwg.mxu0
    %v380 = vpack.c.bf16 %v310, %v308
    %s381 = scalar_lea.vmem %s5, 32
    %v382 = vld [vmem:[%s381] sm:$0xf]
    %v383 = vld [vmem:[%s381 + $0x4] sm:$0xf]
    %v384 = vld [vmem:[%s381 + $0x8] sm:$0xf]
    %v385 = vld [vmem:[%s381 + $0xc] sm:$0xf]
    %v390 = vunpack.c.l.b16 %v382
    %v391 = vunpack.c.l.b16 %v383
    %v392 = vunpack.c.l.b16 %v384
    %v393 = vunpack.c.l.b16 %v385
    %v394 = vpack.c.b16 %v391, %v390
    %v395 = vpack.c.b16 %v393, %v392
    %v399 = vsel %vm192, %v380, 0
    %401 = vmatpush.bf16.msra.mxu0 0
    %402 = vmatpush.bf16.msra.mxu0 0
    %403 = vmatpush.bf16.msra.mxu0 0
    %404 = vmatpush.bf16.msra.mxu0 0
    %405 = vmatpush.bf16.msra.mxu0 0
    %406 = vmatpush.bf16.msra.mxu0 0
    %407 = vmatpush.bf16.msra.mxu0 %v395
    %408 = vmatpush.bf16.msra.mxu0 %v394
    %409 = vmatmul.bf16.gmra.mxu0 %v399
    %v410 = vpop.f32.mrf.mxu0
    %v411 = vadd.f32 0.0, %v410
    %v412 = vpop.f32.mrf.mxu0
    %v413 = vadd.f32 0.0, %v412
    %414 = vdwg.mxu0
    %v415 = vadd.f32 %v376, %v411
    %v416 = vadd.f32 %v378, %v413
    %v417 = vld [vmem:[#allocation9] sm:$0x1]
    %v419 = vperm.slane %v417, 0
    %v421 = vadd.f32 %v415, %v419
    %v422 = vadd.f32 %v416, %v419
    %v423 = vsel %vm192, %v421, 0.0
    %424 = vadd.xlane.f32.xlu0 %v423
    %v425 = vpop.xlane.xlu0 %424
    %v426 = vsel %vm192, %v422, 0.0
    %427 = vadd.xlane.f32.xlu0 %v426
    %v428 = vpop.xlane.xlu0 %427
    %v429 = vmul.f32 %v425, %v205
    %v430 = vmul.f32 %v428, %v205
    %v431 = vmul.f32 %v421, %v421
    %v432 = vmul.f32 %v422, %v422
    %v433 = vsel %vm192, %v431, 0.0
    %434 = vadd.xlane.f32.xlu0 %v433
    %v435 = vpop.xlane.xlu0 %434
    %v436 = vsel %vm192, %v432, 0.0
    %437 = vadd.xlane.f32.xlu0 %v436
    %v438 = vpop.xlane.xlu0 %437
    %v439 = vmul.f32 %v435, %v205
    %v440 = vmul.f32 %v438, %v205
    %v441 = vmul.f32 %v429, %v429
    %v442 = vmul.f32 %v430, %v430
    %v443 = vsub.f32 %v439, %v441
    %v444 = vsub.f32 %v440, %v442
    %v445 = vsub.f32 %v421, %v429
    %v446 = vsub.f32 %v422, %v430
    %v447 = vadd.f32 %v443, 1e-05
    %v448 = vadd.f32 %v444, 1e-05
    %v449 = vrsqrt.pop %v447
    %v450 = vmul.f32 %v449, %v447
    %v451 = vmul.f32 %v450, %v449
    %v452 = vmul.f32 0.5, %v451
    %v453 = vsub.f32 1.5, %v452
    %v454 = vmul.f32 %v449, %v453
    %vm455 = vweird.f32 %v447
    %vm456 = vweird.f32 %v449
    %vm457 = vmor %vm455, %vm456
    %v458 = vsel %vm457, %v449, %v454
    %v459 = vrsqrt.pop %v448
    %v460 = vmul.f32 %v459, %v448
    %v461 = vmul.f32 %v460, %v459
    %v462 = vmul.f32 0.5, %v461
    %v463 = vsub.f32 1.5, %v462
    %v464 = vmul.f32 %v459, %v463
    %vm465 = vweird.f32 %v448
    %vm466 = vweird.f32 %v459
    %vm467 = vmor %vm465, %vm466
    %v468 = vsel %vm467, %v459, %v464
    %v469 = vmul.f32 %v445, %v458
    %v470 = vmul.f32 %v446, %v468
    %v471 = vld [vmem:[#allocation11] sm:$0x1]
    %v473 = vperm.slane %v471, 0
    %v475 = vmul.f32 %v469, %v473
    %v476 = vmul.f32 %v470, %v473
    %v477 = vld [vmem:[%s8] sm:$0x1]
    %v479 = vperm.slane %v477, 0
    %v481 = vadd.f32 %v475, %v479
    %v482 = vadd.f32 %v476, %v479
    %v483 = vmax.f32 %v481, 0.0
    %v484 = vmax.f32 %v482, 0.0
    %v485 = vld [vmem:[%s9] sm:$0x1]
    %v487 = vperm.slane %v485, 0
    %v489 = vmul.f32 %v483, %v487
    %v490 = vmul.f32 %v484, %v487
    %v491 = vsel %vm192, %v489, 0.0
    %492 = vadd.xlane.f32.xlu0 %v491
    %v493 = vpop.xlane.xlu0 %492
    %v494 = vsel %vm192, %v490, 0.0
    %495 = vadd.xlane.f32.xlu0 %v494
    %v496 = vpop.xlane.xlu0 %495
    %s497 = sld [smem:[#allocation2]]
    %v498 = vstv %s497
    %v499 = vadd.f32 %v493, %v498
    %v500 = vadd.f32 %v496, %v498
    %v501 = vmax.f32 %v499, 0.0
    %v502 = vmax.f32 %v500, 0.0
    %v505 = vlaneseq
    %v506 = vand.u32 %v505, 127
    %v507 = vperm.slane %v501, %v506
    %v508 = vperm.slane %v502, %v506
    %vm509 = vcmask 1041409
    %v510 = vsel %vm509, %v508, %v507
    %vm512 = vcmask 58368
    %513 = vst.msk [vmem:[#allocation12] sm:$0x3] %vm512, %v510
    // Predicated region
    $region74: #{tpu_custom_call.1} parent=1 // pred_check
      _
    $region75: #{tpu_custom_call.1} parent=1 // pred_check_branch
      %515 = sbr.rel (0) target = $region77
    $region76: #{tpu_custom_call.1} parent=1 // pred_region
      %517 = vsyncadd [#allocation5], 0
      %s519 = sshll.u32 [#allocation12], 4
      %s520 = int_to_ptr.vmem [resolvable:$true] %s519
      %s521 = sshll.u32 %s13, 4
      %s522 = int_to_ptr.hbm [resolvable:$true] %s521
      %524 = dma.vmem_to_hbm [thread:$0]  %s520, 32, %s522, [#allocation5]
    $region77: #{tpu_custom_call.1} parent=1 // pred_fallthru
      _
    // Predicated region
    $region78: #{tpu_custom_call.1} parent=1 // pred_check
      _
    $region79: #{tpu_custom_call.1} parent=1 // pred_check_branch
      %526 = sbr.rel (0) target = $region81
    $region80: #{tpu_custom_call.1} parent=1 // pred_region
      %528 = dma.done [#allocation5], 32
    $region81: #{tpu_custom_call.1} parent=1 // pred_fallthru
      _
    %529 = vsyncpa [#allocation4], 1
    %530 = vsyncpa [#allocation7], 1
    %531 = vsyncpa [#allocation10], 1
    %532 = vsyncpa [#allocation5], 1

</llo_original>
